<compile_context>
chip_gen: v7x
topology: tpu7x:2x2x1
jax: 0.10.0
libtpu: 0.0.40
codegen_flags: <defaults>
</compile_context>

<pallas_src>
import math
import jax
import jax.numpy as jnp
from jax.experimental import pallas as pl
from jax.experimental.pallas import tpu as pltpu


def mlp_kernel(x_ref, w1_ref, b1_ref, w2_ref, b2_ref, w3_ref, b3_ref, o_ref):
    x = x_ref[...]  # (TB, 4) f32 tile

    # hidden1 + ReLU
    h1 = jnp.dot(x, w1_ref[...], preferred_element_type=jnp.float32) + b1_ref[...]
    h1 = jnp.maximum(h1, 0.0)

    # hidden2 + ReLU
    h2 = jnp.dot(h1, w2_ref[...], preferred_element_type=jnp.float32) + b2_ref[...]
    h2 = jnp.maximum(h2, 0.0)

    # hidden3 + numerically-stable Softmax over classes (dim=1)
    z = jnp.dot(h2, w3_ref[...], preferred_element_type=jnp.float32) + b3_ref[...]
    z = z - jnp.max(z, axis=-1, keepdims=True)
    e = jnp.exp(z)
    inv_denom = pl.reciprocal(jnp.sum(e, axis=-1, keepdims=True), approx=False)
    o_ref[...] = e * inv_denom


def _round_up(n, m):
    return ((n + m - 1) // m) * m


def mlp_forward(x, params, *, tb=4096):
    """Forward pass. tb = max batch-tile size (rows per grid step, multiple of 8)."""
    w1, b1, w2, b2, w3, b3 = params

    # PyTorch module does X.float() on entry.
    x = x.astype(jnp.float32)

    B, n_in = x.shape
    n_out = w3.shape[1]

    # Batch tile: multiple of 8 (f32 sublane), capped at `tb`.
    TB = min(_round_up(int(tb), 8), _round_up(B, 8))
    Bp = _round_up(B, TB)
    if Bp != B:
        # Zero-pad extra rows; they produce finite softmax values and are sliced off below.
        x = jnp.pad(x, ((0, Bp - B), (0, 0)))

    grid = (Bp // TB,)

    def resident(shape):
        # Full-array spec with constant index_map: DMA'd once, stays resident in VMEM.
        return pl.BlockSpec(shape, lambda i: (0, 0))

    out = pl.pallas_call(
        mlp_kernel,
        out_shape=jax.ShapeDtypeStruct((Bp, n_out), jnp.float32),
        grid=grid,
        in_specs=[
            pl.BlockSpec((TB, n_in), lambda i: (i, 0)),   # x: tiled over batch
            resident(w1.shape), resident(b1.shape),
            resident(w2.shape), resident(b2.shape),
            resident(w3.shape), resident(b3.shape),
        ],
        out_specs=pl.BlockSpec((TB, n_out), lambda i: (i, 0)),
        compiler_params=pltpu.CompilerParams(
            dimension_semantics=("parallel",),  # v7x: shard batch grid across both TCs
        ),
    )(x, w1, b1, w2, b2, w3, b3)

    return out[:B]


def _uniform(key, shape, bound):
    return jax.random.uniform(key, shape, jnp.float32, minval=-bound, maxval=bound)


def init_params(key, n_inputs=4):
    """Deterministic init matching the PyTorch module's shapes/init schemes.

    Weights are produced directly in (in, out) layout.
    """
    ks = jax.random.split(key, 6)

    # hidden1: Linear(n_inputs, 10), kaiming_uniform_(relu): bound = sqrt(6 / fan_in)
    w1 = _uniform(ks[0], (n_inputs, 10), math.sqrt(6.0 / n_inputs))
    b1 = _uniform(ks[1], (1, 10), 1.0 / math.sqrt(n_inputs))

    # hidden2: Linear(10, 8), kaiming_uniform_(relu)
    w2 = _uniform(ks[2], (10, 8), math.sqrt(6.0 / 10))
    b2 = _uniform(ks[3], (1, 8), 1.0 / math.sqrt(10))

    # hidden3: Linear(8, 3), xavier_uniform_: bound = sqrt(6 / (fan_in + fan_out))
    w3 = _uniform(ks[4], (8, 3), math.sqrt(6.0 / (8 + 3)))
    b3 = _uniform(ks[5], (1, 3), 1.0 / math.sqrt(8))

    return (w1, b1, w2, b2, w3, b3)


def reference_forward(x, params):
    # Pure-JAX reference for sanity checking.
    w1, b1, w2, b2, w3, b3 = params
    x = x.astype(jnp.float32)
    h1 = jnp.maximum(x @ w1 + b1, 0.0)
    h2 = jnp.maximum(h1 @ w2 + b2, 0.0)
    z = h2 @ w3 + b3
    return jax.nn.softmax(z, axis=1)


if __name__ == "__main__":
    key = jax.random.PRNGKey(0)
    k_params, k_x1, k_x2 = jax.random.split(key, 3)

    n_inputs = 4  # iris features
    params = init_params(k_params, n_inputs)

    # Small single-tile case (matches the original toy batch size).
    batch = 8
    x = jax.random.normal(k_x1, (batch, n_inputs), dtype=jnp.float32)
    out = jax.block_until_ready(mlp_forward(x, params))
    ref = reference_forward(x, params)
    assert out.shape == (batch, 3)
    assert jnp.allclose(out, ref, atol=1e-5, rtol=1e-5)
    assert jnp.allclose(jnp.sum(out, axis=1), jnp.ones((batch,)), atol=1e-5)

    # Multi-tile case: exercises the batch grid, batch padding, and resident-weight specs.
    batch2 = 200  # padded to 256 rows -> grid of 4 steps at tb=64
    x2 = jax.random.normal(k_x2, (batch2, n_inputs), dtype=jnp.float32)
    out2 = jax.block_until_ready(mlp_forward(x2, params, tb=64))
    ref2 = reference_forward(x2, params)
    assert out2.shape == (batch2, 3)
    assert jnp.allclose(out2, ref2, atol=1e-5, rtol=1e-5)
    assert jnp.allclose(jnp.sum(out2, axis=1), jnp.ones((batch2,)), atol=1e-5)

    print("KERNEL_OK")
</pallas_src>

<mosaic_0001>
module attributes {stable_mosaic.version = 11 : i64} {
  func.func @mlp_kernel(%arg0: i32, %arg1: memref<8x4xf32, #tpu.memory_space<vmem>>, %arg2: memref<4x10xf32, #tpu.memory_space<vmem>>, %arg3: memref<1x10xf32, #tpu.memory_space<vmem>>, %arg4: memref<10x8xf32, #tpu.memory_space<vmem>>, %arg5: memref<1x8xf32, #tpu.memory_space<vmem>>, %arg6: memref<8x3xf32, #tpu.memory_space<vmem>>, %arg7: memref<1x3xf32, #tpu.memory_space<vmem>>, %arg8: memref<8x3xf32, #tpu.memory_space<vmem>>) attributes {dimension_semantics = [#tpu.dimension_semantics<parallel>], iteration_bounds = array<i64: 1>, scalar_prefetch = 0 : i64, scratch_operands = 0 : i64, tpu.core_type = #tpu.core_type<tc>, window_params = [{transform_indices = @transform_0, window_bounds = array<i64: 8, 4>}, {pipeline_mode = #tpu.pipeline_mode<synchronous>, transform_indices = @transform_1, window_bounds = array<i64: 4, 10>}, {pipeline_mode = #tpu.pipeline_mode<synchronous>, transform_indices = @transform_2, window_bounds = array<i64: 1, 10>}, {pipeline_mode = #tpu.pipeline_mode<synchronous>, transform_indices = @transform_3, window_bounds = array<i64: 10, 8>}, {pipeline_mode = #tpu.pipeline_mode<synchronous>, transform_indices = @transform_4, window_bounds = array<i64: 1, 8>}, {pipeline_mode = #tpu.pipeline_mode<synchronous>, transform_indices = @transform_5, window_bounds = array<i64: 8, 3>}, {pipeline_mode = #tpu.pipeline_mode<synchronous>, transform_indices = @transform_6, window_bounds = array<i64: 1, 3>}, {transform_indices = @transform_7, window_bounds = array<i64: 8, 3>}]} {
    %c0 = arith.constant 0 : index
    %c0_0 = arith.constant 0 : index
    %0 = vector.load %arg1[%c0, %c0_0] : memref<8x4xf32, #tpu.memory_space<vmem>>, vector<8x4xf32>
    %c0_1 = arith.constant 0 : index
    %c0_2 = arith.constant 0 : index
    %1 = vector.load %arg2[%c0_1, %c0_2] : memref<4x10xf32, #tpu.memory_space<vmem>>, vector<4x10xf32>
    %cst = arith.constant dense<0.000000e+00> : vector<8x10xf32>
    %2 = tpu.matmul %0, %1, %cst {dimension_numbers = #tpu.dot_dimension_numbers<[1], [0], [0], [1], [0, 0, 1, 1], [], []>} : vector<8x4xf32>, vector<4x10xf32>, vector<8x10xf32> -> vector<8x10xf32>
    %c0_3 = arith.constant 0 : index
    %c0_4 = arith.constant 0 : index
    %3 = vector.load %arg3[%c0_3, %c0_4] : memref<1x10xf32, #tpu.memory_space<vmem>>, vector<1x10xf32>
    %4 = vector.broadcast %3 : vector<1x10xf32> to vector<8x10xf32>
    %5 = arith.addf %2, %4 : vector<8x10xf32>
    %cst_5 = arith.constant 0.000000e+00 : f32
    %6 = vector.broadcast %cst_5 : f32 to vector<8x10xf32>
    %7 = arith.maximumf %5, %6 : vector<8x10xf32>
    %c0_6 = arith.constant 0 : index
    %c0_7 = arith.constant 0 : index
    %8 = vector.load %arg4[%c0_6, %c0_7] : memref<10x8xf32, #tpu.memory_space<vmem>>, vector<10x8xf32>
    %cst_8 = arith.constant dense<0.000000e+00> : vector<8x8xf32>
    %9 = tpu.matmul %7, %8, %cst_8 {dimension_numbers = #tpu.dot_dimension_numbers<[1], [0], [0], [1], [0, 0, 1, 1], [], []>} : vector<8x10xf32>, vector<10x8xf32>, vector<8x8xf32> -> vector<8x8xf32>
    %c0_9 = arith.constant 0 : index
    %c0_10 = arith.constant 0 : index
    %10 = vector.load %arg5[%c0_9, %c0_10] : memref<1x8xf32, #tpu.memory_space<vmem>>, vector<1x8xf32>
    %11 = vector.broadcast %10 : vector<1x8xf32> to vector<8x8xf32>
    %12 = arith.addf %9, %11 : vector<8x8xf32>
    %cst_11 = arith.constant 0.000000e+00 : f32
    %13 = vector.broadcast %cst_11 : f32 to vector<8x8xf32>
    %14 = arith.maximumf %12, %13 : vector<8x8xf32>
    %c0_12 = arith.constant 0 : index
    %c0_13 = arith.constant 0 : index
    %15 = vector.load %arg6[%c0_12, %c0_13] : memref<8x3xf32, #tpu.memory_space<vmem>>, vector<8x3xf32>
    %cst_14 = arith.constant dense<0.000000e+00> : vector<8x3xf32>
    %16 = tpu.matmul %14, %15, %cst_14 {dimension_numbers = #tpu.dot_dimension_numbers<[1], [0], [0], [1], [0, 0, 1, 1], [], []>} : vector<8x8xf32>, vector<8x3xf32>, vector<8x3xf32> -> vector<8x3xf32>
    %c0_15 = arith.constant 0 : index
    %c0_16 = arith.constant 0 : index
    %17 = vector.load %arg7[%c0_15, %c0_16] : memref<1x3xf32, #tpu.memory_space<vmem>>, vector<1x3xf32>
    %18 = vector.broadcast %17 : vector<1x3xf32> to vector<8x3xf32>
    %19 = arith.addf %16, %18 : vector<8x3xf32>
    %cst_17 = arith.constant dense<0xFF800000> : vector<8xf32>
    %20 = vector.multi_reduction <maximumf>, %19, %cst_17 [1] : vector<8x3xf32> to vector<8xf32>
    %21 = vector.shape_cast %20 : vector<8xf32> to vector<8x1xf32>
    %22 = vector.broadcast %21 : vector<8x1xf32> to vector<8x3xf32>
    %23 = arith.subf %19, %22 : vector<8x3xf32>
    %24 = math.exp %23 : vector<8x3xf32>
    %cst_18 = arith.constant dense<0.000000e+00> : vector<8xf32>
    %25 = vector.multi_reduction <add>, %24, %cst_18 [1] : vector<8x3xf32> to vector<8xf32>
    %26 = vector.shape_cast %25 : vector<8xf32> to vector<8x1xf32>
    %27 = tpu.reciprocal %26 : vector<8x1xf32> -> vector<8x1xf32>
    %28 = vector.broadcast %27 : vector<8x1xf32> to vector<8x3xf32>
    %29 = arith.mulf %24, %28 : vector<8x3xf32>
    %c0_19 = arith.constant 0 : index
    %c0_20 = arith.constant 0 : index
    %30 = vector.load %arg8[%c0_19, %c0_20] : memref<8x3xf32, #tpu.memory_space<vmem>>, vector<8x3xf32>
    tpu.vector_store %arg8[%c0_19, %c0_20], %29 {strides = array<i32>} : memref<8x3xf32, #tpu.memory_space<vmem>>, vector<8x3xf32>,
    return
  }
  func.func @transform_0(%arg0: i32) -> (i32, i32) {
    %c0_i32 = arith.constant 0 : i32
    %c0_i32_0 = arith.constant 0 : i32
    return %arg0, %c0_i32 : i32, i32
  }
  func.func @transform_1(%arg0: i32) -> (i32, i32) {
    %c0_i32 = arith.constant 0 : i32
    %c0_i32_0 = arith.constant 0 : i32
    %c0_i32_1 = arith.constant 0 : i32
    return %c0_i32, %c0_i32_0 : i32, i32
  }
  func.func @transform_2(%arg0: i32) -> (i32, i32) {
    %c0_i32 = arith.constant 0 : i32
    %c0_i32_0 = arith.constant 0 : i32
    %c0_i32_1 = arith.constant 0 : i32
    return %c0_i32, %c0_i32_0 : i32, i32
  }
  func.func @transform_3(%arg0: i32) -> (i32, i32) {
    %c0_i32 = arith.constant 0 : i32
    %c0_i32_0 = arith.constant 0 : i32
    %c0_i32_1 = arith.constant 0 : i32
    return %c0_i32, %c0_i32_0 : i32, i32
  }
  func.func @transform_4(%arg0: i32) -> (i32, i32) {
    %c0_i32 = arith.constant 0 : i32
    %c0_i32_0 = arith.constant 0 : i32
    %c0_i32_1 = arith.constant 0 : i32
    return %c0_i32, %c0_i32_0 : i32, i32
  }
  func.func @transform_5(%arg0: i32) -> (i32, i32) {
    %c0_i32 = arith.constant 0 : i32
    %c0_i32_0 = arith.constant 0 : i32
    %c0_i32_1 = arith.constant 0 : i32
    return %c0_i32, %c0_i32_0 : i32, i32
  }
  func.func @transform_6(%arg0: i32) -> (i32, i32) {
    %c0_i32 = arith.constant 0 : i32
    %c0_i32_0 = arith.constant 0 : i32
    %c0_i32_1 = arith.constant 0 : i32
    return %c0_i32, %c0_i32_0 : i32, i32
  }
  func.func @transform_7(%arg0: i32) -> (i32, i32) {
    %c0_i32 = arith.constant 0 : i32
    %c0_i32_0 = arith.constant 0 : i32
    return %arg0, %c0_i32 : i32, i32
  }
}

</mosaic_0001>

<llo_original>
// kernel: tpu_custom_call.1
$region0: #{tpu_custom_call.1}
  #allocation0 [shape = 'u32[]', space=smem, size = 0x4, offset = 0x4, fixed_abs, tag = 'smem constant byte address 0x4 - core index']
  #allocation1 [shape = 'u32[144,128]{1,0:T(1,128)}', space=vmem, size = 0x12000, scoped, tag = 'internal scratch']
  %s0 = inlined_call_operand.vmem [shape: f32[8,4], index: 0, kind: input, shape index: {}]
  %s1 = inlined_call_operand.vmem [shape: f32[4,10], index: 1, kind: input, shape index: {}]
  %s2 = inlined_call_operand.vmem [shape: f32[1,10], index: 2, kind: input, shape index: {}]
  %s3 = inlined_call_operand.vmem [shape: f32[10,8], index: 3, kind: input, shape index: {}]
  %s4 = inlined_call_operand.vmem [shape: f32[1,8], index: 4, kind: input, shape index: {}]
  %s5 = inlined_call_operand.vmem [shape: f32[8,3], index: 5, kind: input, shape index: {}]
  %s6 = inlined_call_operand.vmem [shape: f32[1,3], index: 6, kind: input, shape index: {}]
  %s7 = inlined_call_operand.vmem [shape: f32[8,3], index: 7, kind: output, shape index: {}]
  %s8 = sld [smem:[#allocation0]]
  $region38: #{tpu_custom_call.1} parent=0
    _
  %s10 = ssub.s32 1, %s8
  %s11 = scalar_select 0, %s10, %s8
  // Predicated region
  $region2: #{tpu_custom_call.1} parent=0 // pred_check
    _
  $region3: #{tpu_custom_call.1} parent=0 // pred_check_branch
    %13 = sbr.rel (0) target = $region5
  $region4: #{tpu_custom_call.1} parent=0 // pred_region
    _
  $region5: #{tpu_custom_call.1} parent=0 // pred_fallthru
    _
  // Predicated region
  $region6: #{tpu_custom_call.1} parent=0 // pred_check
    _
  $region7: #{tpu_custom_call.1} parent=0 // pred_check_branch
    %15 = sbr.rel (0) target = $region9
  $region8: #{tpu_custom_call.1} parent=0 // pred_region
    _
  $region9: #{tpu_custom_call.1} parent=0 // pred_fallthru
    _
  // Predicated region
  $region10: #{tpu_custom_call.1} parent=0 // pred_check
    _
  $region11: #{tpu_custom_call.1} parent=0 // pred_check_branch
    %17 = sbr.rel (0) target = $region13
  $region12: #{tpu_custom_call.1} parent=0 // pred_region
    _
  $region13: #{tpu_custom_call.1} parent=0 // pred_fallthru
    _
  // Predicated region
  $region14: #{tpu_custom_call.1} parent=0 // pred_check
    _
  $region15: #{tpu_custom_call.1} parent=0 // pred_check_branch
    %19 = sbr.rel (0) target = $region17
  $region16: #{tpu_custom_call.1} parent=0 // pred_region
    _
  $region17: #{tpu_custom_call.1} parent=0 // pred_fallthru
    _
  // Predicated region
  $region18: #{tpu_custom_call.1} parent=0 // pred_check
    _
  $region19: #{tpu_custom_call.1} parent=0 // pred_check_branch
    %21 = sbr.rel (0) target = $region21
  $region20: #{tpu_custom_call.1} parent=0 // pred_region
    _
  $region21: #{tpu_custom_call.1} parent=0 // pred_fallthru
    _
  // Predicated region
  $region22: #{tpu_custom_call.1} parent=0 // pred_check
    _
  $region23: #{tpu_custom_call.1} parent=0 // pred_check_branch
    %23 = sbr.rel (0) target = $region25
  $region24: #{tpu_custom_call.1} parent=0 // pred_region
    _
  $region25: #{tpu_custom_call.1} parent=0 // pred_fallthru
    _
  // Predicated region
  $region26: #{tpu_custom_call.1} parent=0 // pred_check
    _
  $region27: #{tpu_custom_call.1} parent=0 // pred_check_branch
    %25 = sbr.rel (0) target = $region29
  $region28: #{tpu_custom_call.1} parent=0 // pred_region
    _
  $region29: #{tpu_custom_call.1} parent=0 // pred_fallthru
    _
  %v26 = vld [vmem:[%s0] sm:$0xff]
  %v27 = vld [vmem:[%s1] sm:$0xf]
  %v28 = vld [vmem:[%s2] sm:$0x1]
  %v30 = vlaneseq
  %v31 = vshrl.u32 %v30, 7
  %v32 = vsub.s32 0, %v31
  %v33 = vrot.slane %v28, %v32
  %vm35 = vcmask 31744
  %v37 = vsel %vm35, %v26, 0
  %vm39 = vcmask 1043456
  %v41 = vsel %vm39, %v27, 0
  %43 = vmatprep.subr.mxu0 0.0
  %44 = vmatpush1.msra.mxu0 %v41
  %45 = vmatprep.subr.mxu0 0.0
  %46 = vmatpush1.msra.mxu0 0.0
  %47 = vmatprep.subr.mxu0 0.0
  %48 = vmatpush1.msra.mxu0 0.0
  %49 = vmatprep.subr.mxu0 0.0
  %50 = vmatpush1.msra.mxu0 0.0
  %51 = vmatprep.subr.mxu0 0.0
  %52 = vmatpush1.msra.mxu0 0.0
  %53 = vmatprep.subr.mxu0 0.0
  %54 = vmatpush1.msra.mxu0 0.0
  %55 = vmatprep.subr.mxu0 0.0
  %56 = vmatpush1.msra.mxu0 0.0
  %57 = vmatprep.subr.mxu0 0.0
  %58 = vmatpush1.msra.mxu0 0.0
  %59 = vmatprep.subr.mxu0 0.0
  %60 = vmatpush1.msra.mxu0 0.0
  %61 = vmatprep.subr.mxu0 0.0
  %62 = vmatpush1.msra.mxu0 0.0
  %63 = vmatprep.subr.mxu0 0.0
  %64 = vmatpush1.msra.mxu0 0.0
  %65 = vmatprep.subr.mxu0 0.0
  %66 = vmatpush1.msra.mxu0 0.0
  %67 = vmatprep.subr.mxu0 0.0
  %68 = vmatpush1.msra.mxu0 0.0
  %69 = vmatprep.subr.mxu0 0.0
  %70 = vmatpush1.msra.mxu0 0.0
  %71 = vmatprep.subr.mxu0 0.0
  %72 = vmatpush1.msra.mxu0 0.0
  %73 = vmatprep.subr.mxu0 0.0
  %74 = vmatpush1.msra.mxu0 0.0
  %75 = vmatprep.subr.mxu0 0.0
  %76 = vmatpush1.msra.mxu0 0.0
  %77 = vmatprep.subr.mxu0 0.0
  %78 = vmatpush1.msra.mxu0 0.0
  %79 = vmatprep.subr.mxu0 0.0
  %80 = vmatpush1.msra.mxu0 0.0
  %81 = vmatprep.subr.mxu0 0.0
  %82 = vmatpush1.msra.mxu0 0.0
  %83 = vmatprep.subr.mxu0 0.0
  %84 = vmatpush1.msra.mxu0 0.0
  %85 = vmatprep.subr.mxu0 0.0
  %86 = vmatpush1.msra.mxu0 0.0
  %87 = vmatprep.subr.mxu0 0.0
  %88 = vmatpush1.msra.mxu0 0.0
  %89 = vmatprep.subr.mxu0 0.0
  %90 = vmatpush1.msra.mxu0 0.0
  %91 = vmatprep.subr.mxu0 0.0
  %92 = vmatpush1.msra.mxu0 0.0
  %93 = vmatprep.subr.mxu0 0.0
  %94 = vmatpush1.msra.mxu0 0.0
  %95 = vmatprep.subr.mxu0 0.0
  %96 = vmatpush1.msra.mxu0 0.0
  %97 = vmatprep.subr.mxu0 0.0
  %98 = vmatpush1.msra.mxu0 0.0
  %99 = vmatprep.subr.mxu0 0.0
  %100 = vmatpush1.msra.mxu0 0.0
  %101 = vmatprep.subr.mxu0 0.0
  %102 = vmatpush1.msra.mxu0 0.0
  %103 = vmatprep.subr.mxu0 0.0
  %104 = vmatpush1.msra.mxu0 0.0
  %105 = vmatprep.subr.mxu0 0.0
  %106 = vmatpush1.msra.mxu0 0.0
  %107 = vmatprep.mubr.f32.mxu0 0.0
  %108 = vmatmul.mubr.f32.gmra.mrb[0].mxu0 %v37
  %v109 = vpop.f32.mrb[0].mxu0
  %v110 = vadd.f32 %v33, %v109
  %v111 = vpop.f32.mrb[0].mxu0
  %112 = vdwg.mxu0
  %v113 = vmax.f32 %v110, 0.0
  %v114 = vld [vmem:[%s3] sm:$0xff]
  %v115 = vld [vmem:[%s3 + $0x8] sm:$0x3]
  %v116 = vld [vmem:[%s4] sm:$0x1]
  %v118 = vlaneseq
  %v119 = vshrl.u32 %v118, 7
  %v120 = vsub.s32 0, %v119
  %v121 = vrot.slane %v116, %v120
  %vm123 = vcmask 80896
  %v125 = vsel %vm123, %v113, 0
  %vm127 = vcmask 1041408
  %v129 = vsel %vm127, %v115, 0
  %131 = vmatprep.subr.mxu0 0.0
  %132 = vmatpush1.msra.mxu0 %v114
  %133 = vmatprep.subr.mxu0 0.0
  %134 = vmatpush1.msra.mxu0 %v129
  %135 = vmatprep.subr.mxu0 0.0
  %136 = vmatpush1.msra.mxu0 0.0
  %137 = vmatprep.subr.mxu0 0.0
  %138 = vmatpush1.msra.mxu0 0.0
  %139 = vmatprep.subr.mxu0 0.0
  %140 = vmatpush1.msra.mxu0 0.0
  %141 = vmatprep.subr.mxu0 0.0
  %142 = vmatpush1.msra.mxu0 0.0
  %143 = vmatprep.subr.mxu0 0.0
  %144 = vmatpush1.msra.mxu0 0.0
  %145 = vmatprep.subr.mxu0 0.0
  %146 = vmatpush1.msra.mxu0 0.0
  %147 = vmatprep.subr.mxu0 0.0
  %148 = vmatpush1.msra.mxu0 0.0
  %149 = vmatprep.subr.mxu0 0.0
  %150 = vmatpush1.msra.mxu0 0.0
  %151 = vmatprep.subr.mxu0 0.0
  %152 = vmatpush1.msra.mxu0 0.0
  %153 = vmatprep.subr.mxu0 0.0
  %154 = vmatpush1.msra.mxu0 0.0
  %155 = vmatprep.subr.mxu0 0.0
  %156 = vmatpush1.msra.mxu0 0.0
  %157 = vmatprep.subr.mxu0 0.0
  %158 = vmatpush1.msra.mxu0 0.0
  %159 = vmatprep.subr.mxu0 0.0
  %160 = vmatpush1.msra.mxu0 0.0
  %161 = vmatprep.subr.mxu0 0.0
  %162 = vmatpush1.msra.mxu0 0.0
  %163 = vmatprep.subr.mxu0 0.0
  %164 = vmatpush1.msra.mxu0 0.0
  %165 = vmatprep.subr.mxu0 0.0
  %166 = vmatpush1.msra.mxu0 0.0
  %167 = vmatprep.subr.mxu0 0.0
  %168 = vmatpush1.msra.mxu0 0.0
  %169 = vmatprep.subr.mxu0 0.0
  %170 = vmatpush1.msra.mxu0 0.0
  %171 = vmatprep.subr.mxu0 0.0
  %172 = vmatpush1.msra.mxu0 0.0
  %173 = vmatprep.subr.mxu0 0.0
  %174 = vmatpush1.msra.mxu0 0.0
  %175 = vmatprep.subr.mxu0 0.0
  %176 = vmatpush1.msra.mxu0 0.0
  %177 = vmatprep.subr.mxu0 0.0
  %178 = vmatpush1.msra.mxu0 0.0
  %179 = vmatprep.subr.mxu0 0.0
  %180 = vmatpush1.msra.mxu0 0.0
  %181 = vmatprep.subr.mxu0 0.0
  %182 = vmatpush1.msra.mxu0 0.0
  %183 = vmatprep.subr.mxu0 0.0
  %184 = vmatpush1.msra.mxu0 0.0
  %185 = vmatprep.subr.mxu0 0.0
  %186 = vmatpush1.msra.mxu0 0.0
  %187 = vmatprep.subr.mxu0 0.0
  %188 = vmatpush1.msra.mxu0 0.0
  %189 = vmatprep.subr.mxu0 0.0
  %190 = vmatpush1.msra.mxu0 0.0
  %191 = vmatprep.subr.mxu0 0.0
  %192 = vmatpush1.msra.mxu0 0.0
  %193 = vmatprep.subr.mxu0 0.0
  %194 = vmatpush1.msra.mxu0 0.0
  %195 = vmatprep.mubr.f32.mxu0 0.0
  %196 = vmatmul.mubr.f32.gmra.mrb[0].mxu0 %v125
  %v197 = vpop.f32.mrb[0].mxu0
  %v198 = vadd.f32 %v121, %v197
  %v199 = vpop.f32.mrb[0].mxu0
  %200 = vdwg.mxu0
  %v201 = vmax.f32 %v198, 0.0
  %v202 = vld [vmem:[%s5] sm:$0xff]
  %v203 = vld [vmem:[%s6] sm:$0x1]
  %v205 = vlaneseq
  %v206 = vshrl.u32 %v205, 7
  %v207 = vsub.s32 0, %v206
  %v208 = vrot.slane %v203, %v207
  %vm210 = vcmask 64512
  %v212 = vsel %vm210, %v201, 0
  %214 = vmatprep.subr.mxu0 0.0
  %215 = vmatpush1.msra.mxu0 %v202
  %216 = vmatprep.subr.mxu0 0.0
  %217 = vmatpush1.msra.mxu0 0.0
  %218 = vmatprep.subr.mxu0 0.0
  %219 = vmatpush1.msra.mxu0 0.0
  %220 = vmatprep.subr.mxu0 0.0
  %221 = vmatpush1.msra.mxu0 0.0
  %222 = vmatprep.subr.mxu0 0.0
  %223 = vmatpush1.msra.mxu0 0.0
  %224 = vmatprep.subr.mxu0 0.0
  %225 = vmatpush1.msra.mxu0 0.0
  %226 = vmatprep.subr.mxu0 0.0
  %227 = vmatpush1.msra.mxu0 0.0
  %228 = vmatprep.subr.mxu0 0.0
  %229 = vmatpush1.msra.mxu0 0.0
  %230 = vmatprep.subr.mxu0 0.0
  %231 = vmatpush1.msra.mxu0 0.0
  %232 = vmatprep.subr.mxu0 0.0
  %233 = vmatpush1.msra.mxu0 0.0
  %234 = vmatprep.subr.mxu0 0.0
  %235 = vmatpush1.msra.mxu0 0.0
  %236 = vmatprep.subr.mxu0 0.0
  %237 = vmatpush1.msra.mxu0 0.0
  %238 = vmatprep.subr.mxu0 0.0
  %239 = vmatpush1.msra.mxu0 0.0
  %240 = vmatprep.subr.mxu0 0.0
  %241 = vmatpush1.msra.mxu0 0.0
  %242 = vmatprep.subr.mxu0 0.0
  %243 = vmatpush1.msra.mxu0 0.0
  %244 = vmatprep.subr.mxu0 0.0
  %245 = vmatpush1.msra.mxu0 0.0
  %246 = vmatprep.subr.mxu0 0.0
  %247 = vmatpush1.msra.mxu0 0.0
  %248 = vmatprep.subr.mxu0 0.0
  %249 = vmatpush1.msra.mxu0 0.0
  %250 = vmatprep.subr.mxu0 0.0
  %251 = vmatpush1.msra.mxu0 0.0
  %252 = vmatprep.subr.mxu0 0.0
  %253 = vmatpush1.msra.mxu0 0.0
  %254 = vmatprep.subr.mxu0 0.0
  %255 = vmatpush1.msra.mxu0 0.0
  %256 = vmatprep.subr.mxu0 0.0
  %257 = vmatpush1.msra.mxu0 0.0
  %258 = vmatprep.subr.mxu0 0.0
  %259 = vmatpush1.msra.mxu0 0.0
  %260 = vmatprep.subr.mxu0 0.0
  %261 = vmatpush1.msra.mxu0 0.0
  %262 = vmatprep.subr.mxu0 0.0
  %263 = vmatpush1.msra.mxu0 0.0
  %264 = vmatprep.subr.mxu0 0.0
  %265 = vmatpush1.msra.mxu0 0.0
  %266 = vmatprep.subr.mxu0 0.0
  %267 = vmatpush1.msra.mxu0 0.0
  %268 = vmatprep.subr.mxu0 0.0
  %269 = vmatpush1.msra.mxu0 0.0
  %270 = vmatprep.subr.mxu0 0.0
  %271 = vmatpush1.msra.mxu0 0.0
  %272 = vmatprep.subr.mxu0 0.0
  %273 = vmatpush1.msra.mxu0 0.0
  %274 = vmatprep.subr.mxu0 0.0
  %275 = vmatpush1.msra.mxu0 0.0
  %276 = vmatprep.subr.mxu0 0.0
  %277 = vmatpush1.msra.mxu0 0.0
  %278 = vmatprep.mubr.f32.mxu0 0.0
  %279 = vmatmul.mubr.f32.gmra.mrb[0].mxu0 %v212
  %v280 = vpop.f32.mrb[0].mxu0
  %v281 = vadd.f32 %v208, %v280
  %v282 = vpop.f32.mrb[0].mxu0
  %283 = vdwg.mxu0
  %vm284 = vcmask 23552
  %v285 = vsel %vm284, %v281, -inf
  %286 = vmax.xlane.f32.xlu0 %v285
  %v287 = vpop.xlane.xlu0 %286
  %v288 = vsub.f32 %v281, %v287
  %v289 = vmul.f32 %v288, 1.442695
  %v290 = vpow.pop %v289
  %v291 = vsel %vm284, %v290, 0.0
  %292 = vadd.xlane.f32.xlu0 %v291
  %v293 = vpop.xlane.xlu0 %292
  %v294 = vrcp.pop %v293
  %v295 = vmul.f32 %v290, %v294
  %296 = vst.msk [vmem:[%s7] sm:$0xff] %vm284, %v295
  // Predicated region
  $region30: #{tpu_custom_call.1} parent=0 // pred_check
    _
  $region31: #{tpu_custom_call.1} parent=0 // pred_check_branch
    %298 = sbr.rel (0) target = $region33
  $region32: #{tpu_custom_call.1} parent=0 // pred_region
    _
  $region33: #{tpu_custom_call.1} parent=0 // pred_fallthru
    _
  // Predicated region
  $region34: #{tpu_custom_call.1} parent=0 // pred_check
    _
  $region35: #{tpu_custom_call.1} parent=0 // pred_check_branch
    %300 = sbr.rel (0) target = $region37
  $region36: #{tpu_custom_call.1} parent=0 // pred_region
    _
  $region37: #{tpu_custom_call.1} parent=0 // pred_fallthru
    _

</llo_original>
